<compile_context>
chip_gen: v5e
topology: v5e:2x2
jax: 0.10.0
libtpu: 0.0.40
codegen_flags: <defaults>
</compile_context>

<pallas_src>
from functools import partial

import jax
import jax.numpy as jnp
from jax import lax
from jax.experimental import pallas as pl
from jax.experimental.pallas import tpu as pltpu

# ---- small, deterministic hyperparameters (consistent with the module) ----
VOCAB_SIZE = 50
EMB_DIM = 32
N_FILTERS = 16
FILTER_SIZES = (3, 4, 5)
OUTPUT_DIM = 4
PAD_IDX = 0
BATCH = 2
SEQ_LEN = 16

MAX_FS = max(FILTER_SIZES)
NB = len(FILTER_SIZES)
NBF = NB * N_FILTERS                                       # merged conv output channels (48)
VALID = tuple(SEQ_LEN - fs + 1 for fs in FILTER_SIZES)     # valid out positions per bank


def _round_up(x, m):
    return (x + m - 1) // m * m


L_OUT_PAD = _round_up(SEQ_LEN - min(FILTER_SIZES) + 1, 8)  # 14 -> 16, sublane aligned
K_PAD = _round_up(MAX_FS * VOCAB_SIZE, 8)                  # 250 -> 256, MXU-friendly K
O_PAD = 128                                                # lane-dense classifier output


def cnn1d_kernel(idx_ref, wbig_ref, bconv_ref, mask_ref, fcw_ref, fcb_ref, out_ref, *, tb):
    """Fused embedding+conv (single matmul) + bias + ReLU + masked max-over-time + linear.

      idx_ref   : [MAX_FS, tb*L_OUT_PAD, 1] int32   tap-shifted, tap-encoded token ids
                                                      (k*V + id, or -1 sentinel)
      wbig_ref  : [K_PAD, NBF]              bf16    folded (table @ conv) weights
      bconv_ref : [1, NBF]                  f32     merged conv biases
      mask_ref  : [L_OUT_PAD, NBF]          f32     1.0 where time position valid for bank
      fcw_ref   : [NBF, O_PAD]              bf16    zero-padded classifier weights
      fcb_ref   : [1, O_PAD]                f32     zero-padded classifier bias
      out_ref   : [tb, O_PAD]               f32
    """
    m = tb * L_OUT_PAD

    # ---- multi-hot over (tap, vocab) lanes: row (b, p) has a 1 at lane k*V + id[b, p+k] ----
    lane = lax.broadcasted_iota(jnp.int32, (m, K_PAD), 1)
    hit = lane == idx_ref[0]
    for k in range(1, MAX_FS):                              # MAX_FS is small & static
        hit = jnp.logical_or(hit, lane == idx_ref[k])
    onehot = jnp.where(hit, 1.0, 0.0).astype(jnp.bfloat16)  # [m, K_PAD]

    # ---- embedding lookup + all conv banks in ONE matmul (K = K_PAD, N = NBF) ----
    conv = jnp.dot(onehot, wbig_ref[...], preferred_element_type=jnp.float32)  # [m, NBF]
    act = jnp.maximum(conv + bconv_ref[...], 0.0)           # bias + ReLU (f32)

    # ---- masked max-over-time (mask zeroes out-of-range positions; ReLU >= 0 so the
    #      max over the valid window is unchanged).  Aligned reshape -> free view. ----
    act3 = act.reshape(tb, L_OUT_PAD, NBF) * mask_ref[...]  # mask broadcasts over batch
    pooled = jnp.max(act3, axis=1)                          # [tb, NBF]

    # ---- classifier head, lane-dense padded output (dropout = identity in eval) ----
    logits = jnp.dot(pooled.astype(jnp.bfloat16), fcw_ref[...],
                     preferred_element_type=jnp.float32) + fcb_ref[...]
    out_ref[...] = logits.astype(out_ref.dtype)


def cnn1d_forward(text, emb_table, conv_ws, conv_bs, fc_w, fc_b, *, batch_tile=None):
    """text: [B, SEQ_LEN] int token ids -> logits [B, OUTPUT_DIM]."""
    B, L = text.shape
    assert L == SEQ_LEN

    if batch_tile is None:
        # tb multiple of 8; for large B this yields an even grid >= 2 so v7x can shard
        # the "parallel" axis across both TensorCores.  VMEM per step is tiny (<1 MiB).
        tb = min(64, _round_up(B, 8))
    else:
        tb = batch_tile
    assert tb % 8 == 0
    B_pad = _round_up(B, tb)

    # ---------------- one-time host-side parameter packing ----------------
    # Fold the embedding table into the conv weights:
    #   conv_out[b, p, (bank, f)] = bias + sum_k table[id[b, p+k]] @ W_bank[k]
    #                             = bias + sum_k Wbig[k*V + id[b, p+k], (bank, f)]
    wbig = jnp.zeros((K_PAD, NBF), jnp.float32)
    for i, (wk, fs) in enumerate(zip(conv_ws, FILTER_SIZES)):        # wk: [fs, E, F]
        for k in range(fs):
            blk = emb_table @ wk[k]                                  # [V, F]
            wbig = wbig.at[k * VOCAB_SIZE:(k + 1) * VOCAB_SIZE,
                           i * N_FILTERS:(i + 1) * N_FILTERS].set(blk)
    wbig = wbig.astype(jnp.bfloat16)
    bconv = jnp.concatenate(conv_bs, axis=0).reshape(1, NBF).astype(jnp.float32)

    # Validity mask: bank i only has SEQ_LEN - fs_i + 1 output positions.
    bank = jnp.repeat(jnp.arange(NB), N_FILTERS)                     # [NBF]
    valid = jnp.asarray(VALID, jnp.int32)[bank]                      # [NBF]
    mask = (jnp.arange(L_OUT_PAD)[:, None] < valid[None, :]).astype(jnp.float32)

    # Classifier padded to 128 lanes (zero columns beyond OUTPUT_DIM).
    fcw = jnp.zeros((NBF, O_PAD), jnp.float32).at[:, :OUTPUT_DIM].set(fc_w)
    fcw = fcw.astype(jnp.bfloat16)
    fcb = jnp.zeros((1, O_PAD), jnp.float32).at[0, :OUTPUT_DIM].set(fc_b)

    # Tap-shifted, tap-encoded token indices (tiny integer bookkeeping on the host).
    # -1 sentinel (batch / time padding) matches no lane -> contributes zero.
    ids = jnp.pad(text.astype(jnp.int32),
                  ((0, B_pad - B), (0, L_OUT_PAD + MAX_FS - 1 - SEQ_LEN)),
                  constant_values=-1)                                # [B_pad, L_OUT_PAD+MAX_FS-1]
    win = jnp.stack([ids[:, k:k + L_OUT_PAD] for k in range(MAX_FS)], axis=0)
    taps = jnp.arange(MAX_FS, dtype=jnp.int32)[:, None, None] * VOCAB_SIZE
    idx_enc = jnp.where(win >= 0, win + taps, -1)                    # [MAX_FS, B_pad, L_OUT_PAD]
    idx_enc = idx_enc.reshape(MAX_FS, B_pad * L_OUT_PAD, 1)

    grid = (B_pad // tb,)
    out = pl.pallas_call(
        partial(cnn1d_kernel, tb=tb),
        out_shape=jax.ShapeDtypeStruct((B_pad, O_PAD), jnp.float32),
        grid_spec=pltpu.PrefetchScalarGridSpec(
            num_scalar_prefetch=0,
            grid=grid,
            in_specs=[
                pl.BlockSpec((MAX_FS, tb * L_OUT_PAD, 1), lambda b: (0, b, 0)),  # ids
                pl.BlockSpec((K_PAD, NBF), lambda b: (0, 0)),                    # folded W
                pl.BlockSpec((1, NBF), lambda b: (0, 0)),                        # conv bias
                pl.BlockSpec((L_OUT_PAD, NBF), lambda b: (0, 0)),                # time mask
                pl.BlockSpec((NBF, O_PAD), lambda b: (0, 0)),                    # fc W
                pl.BlockSpec((1, O_PAD), lambda b: (0, 0)),                      # fc bias
            ],
            out_specs=pl.BlockSpec((tb, O_PAD), lambda b: (b, 0)),
        ),
        compiler_params=pltpu.CompilerParams(dimension_semantics=("parallel",)),
    )(idx_enc, wbig, bconv, mask, fcw, fcb)
    return out[:B, :OUTPUT_DIM]


if __name__ == "__main__":
    key = jax.random.PRNGKey(0)
    keys = jax.random.split(key, 10)

    # --- deterministic synthetic parameters (PyTorch shapes, converted) ---
    emb_table = 0.1 * jax.random.normal(keys[0], (VOCAB_SIZE, EMB_DIM), jnp.float32)
    emb_table = emb_table.at[PAD_IDX].set(0.0)   # nn.Embedding padding_idx behavior

    conv_ws, conv_bs = [], []
    for i, fs in enumerate(FILTER_SIZES):
        # PyTorch Conv1d weight: [out_channels=F, in_channels=E, kernel=fs]
        w_pt = 0.1 * jax.random.normal(keys[1 + i], (N_FILTERS, EMB_DIM, fs), jnp.float32)
        b = 0.1 * jax.random.normal(keys[4 + i], (N_FILTERS,), jnp.float32)
        conv_ws.append(jnp.transpose(w_pt, (2, 1, 0)))   # -> [fs, E, F]
        conv_bs.append(b)

    # PyTorch Linear weight: [O, n*F]; kernel uses its transpose [n*F, O]
    fc_w_pt = 0.1 * jax.random.normal(keys[7], (OUTPUT_DIM, NBF), jnp.float32)
    fc_b = 0.1 * jax.random.normal(keys[8], (OUTPUT_DIM,), jnp.float32)
    fc_w = fc_w_pt.T

    text = jax.random.randint(keys[9], (BATCH, SEQ_LEN), 0, VOCAB_SIZE, dtype=jnp.int32)

    out = jax.block_until_ready(
        cnn1d_forward(text, emb_table, conv_ws, conv_bs, fc_w, fc_b))

    # --- pure-f32 reference (matches the PyTorch module in eval mode) ---
    embedded = jnp.take(emb_table, text, axis=0)                     # [B, L, E]
    pooled_ref = []
    for wk, bb, fs in zip(conv_ws, conv_bs, FILTER_SIZES):
        l_out = SEQ_LEN - fs + 1
        acc = jnp.zeros((BATCH, l_out, N_FILTERS), jnp.float32)
        for k in range(fs):
            acc = acc + jnp.einsum("ble,ef->blf", embedded[:, k:k + l_out, :], wk[k])
        acc = jax.nn.relu(acc + bb)
        pooled_ref.append(jnp.max(acc, axis=1))
    ref_f32 = jnp.concatenate(pooled_ref, axis=-1) @ fc_w + fc_b

    # --- reference mimicking the kernel's numerics (bf16 folded weights, f32 accumulate) ---
    pooled_q = []
    for wk, bb, fs in zip(conv_ws, conv_bs, FILTER_SIZES):
        l_out = SEQ_LEN - fs + 1
        acc = jnp.zeros((BATCH, l_out, N_FILTERS), jnp.float32)
        for k in range(fs):
            folded = (emb_table @ wk[k]).astype(jnp.bfloat16).astype(jnp.float32)  # [V, F]
            acc = acc + jnp.take(folded, text[:, k:k + l_out], axis=0)
        acc = jax.nn.relu(acc + bb)
        pooled_q.append(jnp.max(acc, axis=1))
    cat_q = jnp.concatenate(pooled_q, axis=-1).astype(jnp.bfloat16).astype(jnp.float32)
    fcw_q = fc_w.astype(jnp.bfloat16).astype(jnp.float32)
    ref_q = cat_q @ fcw_q + fc_b

    assert out.shape == (BATCH, OUTPUT_DIM)
    # bf16 quantization of the folded weights vs the f32 PyTorch reference is an
    # intentional approximation (covered by the looser tolerance below).
    assert jnp.allclose(out, ref_q, atol=2e-3, rtol=2e-3), (out, ref_q)
    assert jnp.allclose(out, ref_f32, atol=3e-2, rtol=3e-2), (out, ref_f32)
    print("KERNEL_OK")
</pallas_src>

<mosaic_0001>
module attributes {stable_mosaic.version = 11 : i64} {
  func.func @cnn1d_kernel(%arg0: i32, %arg1: memref<5x128x1xi32, #tpu.memory_space<vmem>>, %arg2: memref<256x48xbf16, #tpu.memory_space<vmem>>, %arg3: memref<1x48xf32, #tpu.memory_space<vmem>>, %arg4: memref<16x48xf32, #tpu.memory_space<vmem>>, %arg5: memref<48x128xbf16, #tpu.memory_space<vmem>>, %arg6: memref<1x128xf32, #tpu.memory_space<vmem>>, %arg7: memref<8x128xf32, #tpu.memory_space<vmem>>) attributes {dimension_semantics = [#tpu.dimension_semantics<parallel>], iteration_bounds = array<i64: 1>, scalar_prefetch = 0 : i64, scratch_operands = 0 : i64, tpu.core_type = #tpu.core_type<tc>, window_params = [{transform_indices = @transform_0, window_bounds = array<i64: 5, 128, 1>}, {pipeline_mode = #tpu.pipeline_mode<synchronous>, transform_indices = @transform_1, window_bounds = array<i64: 256, 48>}, {pipeline_mode = #tpu.pipeline_mode<synchronous>, transform_indices = @transform_2, window_bounds = array<i64: 1, 48>}, {pipeline_mode = #tpu.pipeline_mode<synchronous>, transform_indices = @transform_3, window_bounds = array<i64: 16, 48>}, {pipeline_mode = #tpu.pipeline_mode<synchronous>, transform_indices = @transform_4, window_bounds = array<i64: 48, 128>}, {pipeline_mode = #tpu.pipeline_mode<synchronous>, transform_indices = @transform_5, window_bounds = array<i64: 1, 128>}, {transform_indices = @transform_6, window_bounds = array<i64: 8, 128>}]} {
    %0 = tpu.iota {dimensions = array<i32: 1>} : vector<128x256xi32>
    %c0 = arith.constant 0 : index
    %c0_0 = arith.constant 0 : index
    %c0_1 = arith.constant 0 : index
    %1 = vector.load %arg1[%c0, %c0_0, %c0_1] : memref<5x128x1xi32, #tpu.memory_space<vmem>>, vector<1x128x1xi32>
    %2 = vector.shape_cast %1 : vector<1x128x1xi32> to vector<128x1xi32>
    %3 = vector.broadcast %2 : vector<128x1xi32> to vector<128x256xi32>
    %4 = arith.cmpi eq, %0, %3 : vector<128x256xi32>
    %c1 = arith.constant 1 : index
    %c0_2 = arith.constant 0 : index
    %c0_3 = arith.constant 0 : index
    %5 = vector.load %arg1[%c1, %c0_2, %c0_3] : memref<5x128x1xi32, #tpu.memory_space<vmem>>, vector<1x128x1xi32>
    %6 = vector.shape_cast %5 : vector<1x128x1xi32> to vector<128x1xi32>
    %7 = vector.broadcast %6 : vector<128x1xi32> to vector<128x256xi32>
    %8 = arith.cmpi eq, %0, %7 : vector<128x256xi32>
    %9 = arith.ori %4, %8 : vector<128x256xi1>
    %c2 = arith.constant 2 : index
    %c0_4 = arith.constant 0 : index
    %c0_5 = arith.constant 0 : index
    %10 = vector.load %arg1[%c2, %c0_4, %c0_5] : memref<5x128x1xi32, #tpu.memory_space<vmem>>, vector<1x128x1xi32>
    %11 = vector.shape_cast %10 : vector<1x128x1xi32> to vector<128x1xi32>
    %12 = vector.broadcast %11 : vector<128x1xi32> to vector<128x256xi32>
    %13 = arith.cmpi eq, %0, %12 : vector<128x256xi32>
    %14 = arith.ori %9, %13 : vector<128x256xi1>
    %c3 = arith.constant 3 : index
    %c0_6 = arith.constant 0 : index
    %c0_7 = arith.constant 0 : index
    %15 = vector.load %arg1[%c3, %c0_6, %c0_7] : memref<5x128x1xi32, #tpu.memory_space<vmem>>, vector<1x128x1xi32>
    %16 = vector.shape_cast %15 : vector<1x128x1xi32> to vector<128x1xi32>
    %17 = vector.broadcast %16 : vector<128x1xi32> to vector<128x256xi32>
    %18 = arith.cmpi eq, %0, %17 : vector<128x256xi32>
    %19 = arith.ori %14, %18 : vector<128x256xi1>
    %c4 = arith.constant 4 : index
    %c0_8 = arith.constant 0 : index
    %c0_9 = arith.constant 0 : index
    %20 = vector.load %arg1[%c4, %c0_8, %c0_9] : memref<5x128x1xi32, #tpu.memory_space<vmem>>, vector<1x128x1xi32>
    %21 = vector.shape_cast %20 : vector<1x128x1xi32> to vector<128x1xi32>
    %22 = vector.broadcast %21 : vector<128x1xi32> to vector<128x256xi32>
    %23 = arith.cmpi eq, %0, %22 : vector<128x256xi32>
    %24 = arith.ori %19, %23 : vector<128x256xi1>
    %cst = arith.constant 1.000000e+00 : f32
    %cst_10 = arith.constant 0.000000e+00 : f32
    %25 = vector.broadcast %cst : f32 to vector<128x256xf32>
    %26 = vector.broadcast %cst_10 : f32 to vector<128x256xf32>
    %27 = arith.select %24, %25, %26 : vector<128x256xi1>, vector<128x256xf32>
    %28 = arith.truncf %27 : vector<128x256xf32> to vector<128x256xbf16>
    %c0_11 = arith.constant 0 : index
    %c0_12 = arith.constant 0 : index
    %29 = vector.load %arg2[%c0_11, %c0_12] : memref<256x48xbf16, #tpu.memory_space<vmem>>, vector<256x48xbf16>
    %cst_13 = arith.constant dense<0.000000e+00> : vector<128x48xf32>
    %30 = tpu.matmul %28, %29, %cst_13 {dimension_numbers = #tpu.dot_dimension_numbers<[1], [0], [0], [1], [0, 0, 1, 1], [], []>} : vector<128x256xbf16>, vector<256x48xbf16>, vector<128x48xf32> -> vector<128x48xf32>
    %c0_14 = arith.constant 0 : index
    %c0_15 = arith.constant 0 : index
    %31 = vector.load %arg3[%c0_14, %c0_15] : memref<1x48xf32, #tpu.memory_space<vmem>>, vector<1x48xf32>
    %32 = vector.broadcast %31 : vector<1x48xf32> to vector<128x48xf32>
    %33 = arith.addf %30, %32 : vector<128x48xf32>
    %cst_16 = arith.constant 0.000000e+00 : f32
    %34 = vector.broadcast %cst_16 : f32 to vector<128x48xf32>
    %35 = arith.maximumf %33, %34 : vector<128x48xf32>
    %36 = vector.shape_cast %35 : vector<128x48xf32> to vector<8x16x48xf32>
    %c0_17 = arith.constant 0 : index
    %c0_18 = arith.constant 0 : index
    %37 = vector.load %arg4[%c0_17, %c0_18] : memref<16x48xf32, #tpu.memory_space<vmem>>, vector<16x48xf32>
    %38 = vector.shape_cast %37 : vector<16x48xf32> to vector<1x16x48xf32>
    %39 = vector.broadcast %38 : vector<1x16x48xf32> to vector<8x16x48xf32>
    %40 = arith.mulf %36, %39 : vector<8x16x48xf32>
    %cst_19 = arith.constant dense<0xFF800000> : vector<8x48xf32>
    %41 = vector.multi_reduction <maximumf>, %40, %cst_19 [1] : vector<8x16x48xf32> to vector<8x48xf32>
    %42 = arith.truncf %41 : vector<8x48xf32> to vector<8x48xbf16>
    %c0_20 = arith.constant 0 : index
    %c0_21 = arith.constant 0 : index
    %43 = vector.load %arg5[%c0_20, %c0_21] : memref<48x128xbf16, #tpu.memory_space<vmem>>, vector<48x128xbf16>
    %cst_22 = arith.constant dense<0.000000e+00> : vector<8x128xf32>
    %44 = tpu.matmul %42, %43, %cst_22 {dimension_numbers = #tpu.dot_dimension_numbers<[1], [0], [0], [1], [0, 0, 1, 1], [], []>} : vector<8x48xbf16>, vector<48x128xbf16>, vector<8x128xf32> -> vector<8x128xf32>
    %c0_23 = arith.constant 0 : index
    %c0_24 = arith.constant 0 : index
    %45 = vector.load %arg6[%c0_23, %c0_24] : memref<1x128xf32, #tpu.memory_space<vmem>>, vector<1x128xf32>
    %46 = vector.broadcast %45 : vector<1x128xf32> to vector<8x128xf32>
    %47 = arith.addf %44, %46 : vector<8x128xf32>
    %c0_25 = arith.constant 0 : index
    %c0_26 = arith.constant 0 : index
    %48 = vector.load %arg7[%c0_25, %c0_26] : memref<8x128xf32, #tpu.memory_space<vmem>>, vector<8x128xf32>
    tpu.vector_store %arg7[%c0_25, %c0_26], %47 {strides = array<i32>} : memref<8x128xf32, #tpu.memory_space<vmem>>, vector<8x128xf32>,
    return
  }
  func.func @transform_0(%arg0: i32) -> (i32, i32, i32) {
    %c0_i32 = arith.constant 0 : i32
    %c0_i32_0 = arith.constant 0 : i32
    %c0_i32_1 = arith.constant 0 : i32
    return %c0_i32, %arg0, %c0_i32_0 : i32, i32, i32
  }
  func.func @transform_1(%arg0: i32) -> (i32, i32) {
    %c0_i32 = arith.constant 0 : i32
    %c0_i32_0 = arith.constant 0 : i32
    %c0_i32_1 = arith.constant 0 : i32
    return %c0_i32, %c0_i32_0 : i32, i32
  }
  func.func @transform_2(%arg0: i32) -> (i32, i32) {
    %c0_i32 = arith.constant 0 : i32
    %c0_i32_0 = arith.constant 0 : i32
    %c0_i32_1 = arith.constant 0 : i32
    return %c0_i32, %c0_i32_0 : i32, i32
  }
  func.func @transform_3(%arg0: i32) -> (i32, i32) {
    %c0_i32 = arith.constant 0 : i32
    %c0_i32_0 = arith.constant 0 : i32
    %c0_i32_1 = arith.constant 0 : i32
    return %c0_i32, %c0_i32_0 : i32, i32
  }
  func.func @transform_4(%arg0: i32) -> (i32, i32) {
    %c0_i32 = arith.constant 0 : i32
    %c0_i32_0 = arith.constant 0 : i32
    %c0_i32_1 = arith.constant 0 : i32
    return %c0_i32, %c0_i32_0 : i32, i32
  }
  func.func @transform_5(%arg0: i32) -> (i32, i32) {
    %c0_i32 = arith.constant 0 : i32
    %c0_i32_0 = arith.constant 0 : i32
    %c0_i32_1 = arith.constant 0 : i32
    return %c0_i32, %c0_i32_0 : i32, i32
  }
  func.func @transform_6(%arg0: i32) -> (i32, i32) {
    %c0_i32 = arith.constant 0 : i32
    %c0_i32_0 = arith.constant 0 : i32
    return %arg0, %c0_i32 : i32, i32
  }
}

</mosaic_0001>

<llo_original>
// kernel: tpu_custom_call.1
$region0: #{tpu_custom_call.1}
  #allocation0 [shape = 'u32[]', space=smem, size = 0x4, offset = 0x4, fixed_abs, tag = 'smem constant byte address 0x4 - core index']
  #allocation1 [shape = 'u32[72,128]{1,0:T(1,128)}', space=vmem, size = 0x9000, scoped, tag = 'internal scratch']
  %s0 = inlined_call_operand.vmem [shape: s32[5,128,1], index: 0, kind: input, shape index: {}]
  %s1 = inlined_call_operand.vmem [shape: bf16[256,48], index: 1, kind: input, shape index: {}]
  %s2 = inlined_call_operand.vmem [shape: f32[1,48], index: 2, kind: input, shape index: {}]
  %s3 = inlined_call_operand.vmem [shape: f32[16,48], index: 3, kind: input, shape index: {}]
  %s4 = inlined_call_operand.vmem [shape: bf16[48,128], index: 4, kind: input, shape index: {}]
  %s5 = inlined_call_operand.vmem [shape: f32[1,128], index: 5, kind: input, shape index: {}]
  %s6 = inlined_call_operand.hbm [shape: f32[8,128], index: 6, kind: output, shape index: {}]
  %s7 = sld [smem:[#allocation0]]
  $region34: #{tpu_custom_call.1} parent=0
    _
  %s9 = ssub.s32 1, %s7
  %s10 = scalar_select 0, %s9, %s7
  $region1: #{tpu_custom_call.1} parent=0
    #allocation2 [shape = 'u8[4096]{0}', space=vmem, size = 0x1000, scoped, tag = 'output window, operand 0, single buffered']
    #allocation3 [shape = 's32[1]{0}', space=sflag, size = 0x4, scoped, tag = 'scoped memory for tpu_custom_call.1']
    %11 = vsyncpa [#allocation3], 0
    // Predicated region
    $region2: #{tpu_custom_call.1} parent=1 // pred_check
      _
    $region3: #{tpu_custom_call.1} parent=1 // pred_check_branch
      %13 = sbr.rel (0) target = $region5
    $region4: #{tpu_custom_call.1} parent=1 // pred_region
      _
    $region5: #{tpu_custom_call.1} parent=1 // pred_fallthru
      _
    // Predicated region
    $region6: #{tpu_custom_call.1} parent=1 // pred_check
      _
    $region7: #{tpu_custom_call.1} parent=1 // pred_check_branch
      %15 = sbr.rel (0) target = $region9
    $region8: #{tpu_custom_call.1} parent=1 // pred_region
      _
    $region9: #{tpu_custom_call.1} parent=1 // pred_fallthru
      _
    // Predicated region
    $region10: #{tpu_custom_call.1} parent=1 // pred_check
      _
    $region11: #{tpu_custom_call.1} parent=1 // pred_check_branch
      %17 = sbr.rel (0) target = $region13
    $region12: #{tpu_custom_call.1} parent=1 // pred_region
      _
    $region13: #{tpu_custom_call.1} parent=1 // pred_fallthru
      _
    // Predicated region
    $region14: #{tpu_custom_call.1} parent=1 // pred_check
      _
    $region15: #{tpu_custom_call.1} parent=1 // pred_check_branch
      %19 = sbr.rel (0) target = $region17
    $region16: #{tpu_custom_call.1} parent=1 // pred_region
      _
    $region17: #{tpu_custom_call.1} parent=1 // pred_fallthru
      _
    // Predicated region
    $region18: #{tpu_custom_call.1} parent=1 // pred_check
      _
    $region19: #{tpu_custom_call.1} parent=1 // pred_check_branch
      %21 = sbr.rel (0) target = $region21
    $region20: #{tpu_custom_call.1} parent=1 // pred_region
      _
    $region21: #{tpu_custom_call.1} parent=1 // pred_fallthru
      _
    // Predicated region
    $region22: #{tpu_custom_call.1} parent=1 // pred_check
      _
    $region23: #{tpu_custom_call.1} parent=1 // pred_check_branch
      %23 = sbr.rel (0) target = $region25
    $region24: #{tpu_custom_call.1} parent=1 // pred_region
      _
    $region25: #{tpu_custom_call.1} parent=1 // pred_fallthru
      _
    %v25 = vlaneseq
    %v26 = vand.u32 %v25, 127
    %v27 = vadd.s32 %v26, 128
    %v28 = vld [vmem:[%s0] sm:$0xff]
    %v29 = vld [vmem:[%s0 + $0x8] sm:$0xff]
    %v30 = vld [vmem:[%s0 + $0x10] sm:$0xff]
    %v31 = vld [vmem:[%s0 + $0x18] sm:$0xff]
    %v32 = vld [vmem:[%s0 + $0x20] sm:$0xff]
    %v33 = vld [vmem:[%s0 + $0x28] sm:$0xff]
    %v34 = vld [vmem:[%s0 + $0x30] sm:$0xff]
    %v35 = vld [vmem:[%s0 + $0x38] sm:$0xff]
    %v36 = vld [vmem:[%s0 + $0x40] sm:$0xff]
    %v37 = vld [vmem:[%s0 + $0x48] sm:$0xff]
    %v38 = vld [vmem:[%s0 + $0x50] sm:$0xff]
    %v39 = vld [vmem:[%s0 + $0x58] sm:$0xff]
    %v40 = vld [vmem:[%s0 + $0x60] sm:$0xff]
    %v41 = vld [vmem:[%s0 + $0x68] sm:$0xff]
    %v42 = vld [vmem:[%s0 + $0x70] sm:$0xff]
    %v43 = vld [vmem:[%s0 + $0x78] sm:$0xff]
    %44 = vset.pattern.permute.xlu0 0
    %45 = vperm.xlu0 %44, %v28
    %v46 = vpop.permute.xlu0 %45
    %47 = vset.pattern.permute.xlu0 0
    %48 = vperm.xlu0 %47, %v29
    %v49 = vpop.permute.xlu0 %48
    %50 = vset.pattern.permute.xlu0 0
    %51 = vperm.xlu0 %50, %v30
    %v52 = vpop.permute.xlu0 %51
    %53 = vset.pattern.permute.xlu0 0
    %54 = vperm.xlu0 %53, %v31
    %v55 = vpop.permute.xlu0 %54
    %56 = vset.pattern.permute.xlu0 0
    %57 = vperm.xlu0 %56, %v32
    %v58 = vpop.permute.xlu0 %57
    %59 = vset.pattern.permute.xlu0 0
    %60 = vperm.xlu0 %59, %v33
    %v61 = vpop.permute.xlu0 %60
    %62 = vset.pattern.permute.xlu0 0
    %63 = vperm.xlu0 %62, %v34
    %v64 = vpop.permute.xlu0 %63
    %65 = vset.pattern.permute.xlu0 0
    %66 = vperm.xlu0 %65, %v35
    %v67 = vpop.permute.xlu0 %66
    %68 = vset.pattern.permute.xlu0 0
    %69 = vperm.xlu0 %68, %v36
    %v70 = vpop.permute.xlu0 %69
    %71 = vset.pattern.permute.xlu0 0
    %72 = vperm.xlu0 %71, %v37
    %v73 = vpop.permute.xlu0 %72
    %74 = vset.pattern.permute.xlu0 0
    %75 = vperm.xlu0 %74, %v38
    %v76 = vpop.permute.xlu0 %75
    %77 = vset.pattern.permute.xlu0 0
    %78 = vperm.xlu0 %77, %v39
    %v79 = vpop.permute.xlu0 %78
    %80 = vset.pattern.permute.xlu0 0
    %81 = vperm.xlu0 %80, %v40
    %v82 = vpop.permute.xlu0 %81
    %83 = vset.pattern.permute.xlu0 0
    %84 = vperm.xlu0 %83, %v41
    %v85 = vpop.permute.xlu0 %84
    %86 = vset.pattern.permute.xlu0 0
    %87 = vperm.xlu0 %86, %v42
    %v88 = vpop.permute.xlu0 %87
    %89 = vset.pattern.permute.xlu0 0
    %90 = vperm.xlu0 %89, %v43
    %v91 = vpop.permute.xlu0 %90
    %vm92 = vcmp.eq.s32.totalorder %v26, %v46
    %vm93 = vcmp.eq.s32.totalorder %v27, %v46
    %vm94 = vcmp.eq.s32.totalorder %v26, %v49
    %vm95 = vcmp.eq.s32.totalorder %v27, %v49
    %vm96 = vcmp.eq.s32.totalorder %v26, %v52
    %vm97 = vcmp.eq.s32.totalorder %v27, %v52
    %vm98 = vcmp.eq.s32.totalorder %v26, %v55
    %vm99 = vcmp.eq.s32.totalorder %v27, %v55
    %vm100 = vcmp.eq.s32.totalorder %v26, %v58
    %vm101 = vcmp.eq.s32.totalorder %v27, %v58
    %vm102 = vcmp.eq.s32.totalorder %v26, %v61
    %vm103 = vcmp.eq.s32.totalorder %v27, %v61
    %vm104 = vcmp.eq.s32.totalorder %v26, %v64
    %vm105 = vcmp.eq.s32.totalorder %v27, %v64
    %vm106 = vcmp.eq.s32.totalorder %v26, %v67
    %vm107 = vcmp.eq.s32.totalorder %v27, %v67
    %vm108 = vcmp.eq.s32.totalorder %v26, %v70
    %vm109 = vcmp.eq.s32.totalorder %v27, %v70
    %vm110 = vcmp.eq.s32.totalorder %v26, %v73
    %vm111 = vcmp.eq.s32.totalorder %v27, %v73
    %vm112 = vcmp.eq.s32.totalorder %v26, %v76
    %vm113 = vcmp.eq.s32.totalorder %v27, %v76
    %vm114 = vcmp.eq.s32.totalorder %v26, %v79
    %vm115 = vcmp.eq.s32.totalorder %v27, %v79
    %vm116 = vcmp.eq.s32.totalorder %v26, %v82
    %vm117 = vcmp.eq.s32.totalorder %v27, %v82
    %vm118 = vcmp.eq.s32.totalorder %v26, %v85
    %vm119 = vcmp.eq.s32.totalorder %v27, %v85
    %vm120 = vcmp.eq.s32.totalorder %v26, %v88
    %vm121 = vcmp.eq.s32.totalorder %v27, %v88
    %vm122 = vcmp.eq.s32.totalorder %v26, %v91
    %vm123 = vcmp.eq.s32.totalorder %v27, %v91
    %s124 = scalar_lea.vmem %s0, 128
    %v125 = vld [vmem:[%s124] sm:$0xff]
    %v126 = vld [vmem:[%s124 + $0x8] sm:$0xff]
    %v127 = vld [vmem:[%s124 + $0x10] sm:$0xff]
    %v128 = vld [vmem:[%s124 + $0x18] sm:$0xff]
    %v129 = vld [vmem:[%s124 + $0x20] sm:$0xff]
    %v130 = vld [vmem:[%s124 + $0x28] sm:$0xff]
    %v131 = vld [vmem:[%s124 + $0x30] sm:$0xff]
    %v132 = vld [vmem:[%s124 + $0x38] sm:$0xff]
    %v133 = vld [vmem:[%s124 + $0x40] sm:$0xff]
    %v134 = vld [vmem:[%s124 + $0x48] sm:$0xff]
    %v135 = vld [vmem:[%s124 + $0x50] sm:$0xff]
    %v136 = vld [vmem:[%s124 + $0x58] sm:$0xff]
    %v137 = vld [vmem:[%s124 + $0x60] sm:$0xff]
    %v138 = vld [vmem:[%s124 + $0x68] sm:$0xff]
    %v139 = vld [vmem:[%s124 + $0x70] sm:$0xff]
    %v140 = vld [vmem:[%s124 + $0x78] sm:$0xff]
    %141 = vset.pattern.permute.xlu0 0
    %142 = vperm.xlu0 %141, %v125
    %v143 = vpop.permute.xlu0 %142
    %144 = vset.pattern.permute.xlu0 0
    %145 = vperm.xlu0 %144, %v126
    %v146 = vpop.permute.xlu0 %145
    %147 = vset.pattern.permute.xlu0 0
    %148 = vperm.xlu0 %147, %v127
    %v149 = vpop.permute.xlu0 %148
    %150 = vset.pattern.permute.xlu0 0
    %151 = vperm.xlu0 %150, %v128
    %v152 = vpop.permute.xlu0 %151
    %153 = vset.pattern.permute.xlu0 0
    %154 = vperm.xlu0 %153, %v129
    %v155 = vpop.permute.xlu0 %154
    %156 = vset.pattern.permute.xlu0 0
    %157 = vperm.xlu0 %156, %v130
    %v158 = vpop.permute.xlu0 %157
    %159 = vset.pattern.permute.xlu0 0
    %160 = vperm.xlu0 %159, %v131
    %v161 = vpop.permute.xlu0 %160
    %162 = vset.pattern.permute.xlu0 0
    %163 = vperm.xlu0 %162, %v132
    %v164 = vpop.permute.xlu0 %163
    %165 = vset.pattern.permute.xlu0 0
    %166 = vperm.xlu0 %165, %v133
    %v167 = vpop.permute.xlu0 %166
    %168 = vset.pattern.permute.xlu0 0
    %169 = vperm.xlu0 %168, %v134
    %v170 = vpop.permute.xlu0 %169
    %171 = vset.pattern.permute.xlu0 0
    %172 = vperm.xlu0 %171, %v135
    %v173 = vpop.permute.xlu0 %172
    %174 = vset.pattern.permute.xlu0 0
    %175 = vperm.xlu0 %174, %v136
    %v176 = vpop.permute.xlu0 %175
    %177 = vset.pattern.permute.xlu0 0
    %178 = vperm.xlu0 %177, %v137
    %v179 = vpop.permute.xlu0 %178
    %180 = vset.pattern.permute.xlu0 0
    %181 = vperm.xlu0 %180, %v138
    %v182 = vpop.permute.xlu0 %181
    %183 = vset.pattern.permute.xlu0 0
    %184 = vperm.xlu0 %183, %v139
    %v185 = vpop.permute.xlu0 %184
    %186 = vset.pattern.permute.xlu0 0
    %187 = vperm.xlu0 %186, %v140
    %v188 = vpop.permute.xlu0 %187
    %vm189 = vcmp.eq.s32.totalorder %v26, %v143
    %vm190 = vcmp.eq.s32.totalorder %v27, %v143
    %vm191 = vcmp.eq.s32.totalorder %v26, %v146
    %vm192 = vcmp.eq.s32.totalorder %v27, %v146
    %vm193 = vcmp.eq.s32.totalorder %v26, %v149
    %vm194 = vcmp.eq.s32.totalorder %v27, %v149
    %vm195 = vcmp.eq.s32.totalorder %v26, %v152
    %vm196 = vcmp.eq.s32.totalorder %v27, %v152
    %vm197 = vcmp.eq.s32.totalorder %v26, %v155
    %vm198 = vcmp.eq.s32.totalorder %v27, %v155
    %vm199 = vcmp.eq.s32.totalorder %v26, %v158
    %vm200 = vcmp.eq.s32.totalorder %v27, %v158
    %vm201 = vcmp.eq.s32.totalorder %v26, %v161
    %vm202 = vcmp.eq.s32.totalorder %v27, %v161
    %vm203 = vcmp.eq.s32.totalorder %v26, %v164
    %vm204 = vcmp.eq.s32.totalorder %v27, %v164
    %vm205 = vcmp.eq.s32.totalorder %v26, %v167
    %vm206 = vcmp.eq.s32.totalorder %v27, %v167
    %vm207 = vcmp.eq.s32.totalorder %v26, %v170
    %vm208 = vcmp.eq.s32.totalorder %v27, %v170
    %vm209 = vcmp.eq.s32.totalorder %v26, %v173
    %vm210 = vcmp.eq.s32.totalorder %v27, %v173
    %vm211 = vcmp.eq.s32.totalorder %v26, %v176
    %vm212 = vcmp.eq.s32.totalorder %v27, %v176
    %vm213 = vcmp.eq.s32.totalorder %v26, %v179
    %vm214 = vcmp.eq.s32.totalorder %v27, %v179
    %vm215 = vcmp.eq.s32.totalorder %v26, %v182
    %vm216 = vcmp.eq.s32.totalorder %v27, %v182
    %vm217 = vcmp.eq.s32.totalorder %v26, %v185
    %vm218 = vcmp.eq.s32.totalorder %v27, %v185
    %vm219 = vcmp.eq.s32.totalorder %v26, %v188
    %vm220 = vcmp.eq.s32.totalorder %v27, %v188
    %vm221 = vmor %vm92, %vm189
    %vm222 = vmor %vm93, %vm190
    %vm223 = vmor %vm94, %vm191
    %vm224 = vmor %vm95, %vm192
    %vm225 = vmor %vm96, %vm193
    %vm226 = vmor %vm97, %vm194
    %vm227 = vmor %vm98, %vm195
    %vm228 = vmor %vm99, %vm196
    %vm229 = vmor %vm100, %vm197
    %vm230 = vmor %vm101, %vm198
    %vm231 = vmor %vm102, %vm199
    %vm232 = vmor %vm103, %vm200
    %vm233 = vmor %vm104, %vm201
    %vm234 = vmor %vm105, %vm202
    %vm235 = vmor %vm106, %vm203
    %vm236 = vmor %vm107, %vm204
    %vm237 = vmor %vm108, %vm205
    %vm238 = vmor %vm109, %vm206
    %vm239 = vmor %vm110, %vm207
    %vm240 = vmor %vm111, %vm208
    %vm241 = vmor %vm112, %vm209
    %vm242 = vmor %vm113, %vm210
    %vm243 = vmor %vm114, %vm211
    %vm244 = vmor %vm115, %vm212
    %vm245 = vmor %vm116, %vm213
    %vm246 = vmor %vm117, %vm214
    %vm247 = vmor %vm118, %vm215
    %vm248 = vmor %vm119, %vm216
    %vm249 = vmor %vm120, %vm217
    %vm250 = vmor %vm121, %vm218
    %vm251 = vmor %vm122, %vm219
    %vm252 = vmor %vm123, %vm220
    %s253 = scalar_lea.vmem %s0, 256
    %v254 = vld [vmem:[%s253] sm:$0xff]
    %v255 = vld [vmem:[%s253 + $0x8] sm:$0xff]
    %v256 = vld [vmem:[%s253 + $0x10] sm:$0xff]
    %v257 = vld [vmem:[%s253 + $0x18] sm:$0xff]
    %v258 = vld [vmem:[%s253 + $0x20] sm:$0xff]
    %v259 = vld [vmem:[%s253 + $0x28] sm:$0xff]
    %v260 = vld [vmem:[%s253 + $0x30] sm:$0xff]
    %v261 = vld [vmem:[%s253 + $0x38] sm:$0xff]
    %v262 = vld [vmem:[%s253 + $0x40] sm:$0xff]
    %v263 = vld [vmem:[%s253 + $0x48] sm:$0xff]
    %v264 = vld [vmem:[%s253 + $0x50] sm:$0xff]
    %v265 = vld [vmem:[%s253 + $0x58] sm:$0xff]
    %v266 = vld [vmem:[%s253 + $0x60] sm:$0xff]
    %v267 = vld [vmem:[%s253 + $0x68] sm:$0xff]
    %v268 = vld [vmem:[%s253 + $0x70] sm:$0xff]
    %v269 = vld [vmem:[%s253 + $0x78] sm:$0xff]
    %270 = vset.pattern.permute.xlu0 0
    %271 = vperm.xlu0 %270, %v254
    %v272 = vpop.permute.xlu0 %271
    %273 = vset.pattern.permute.xlu0 0
    %274 = vperm.xlu0 %273, %v255
    %v275 = vpop.permute.xlu0 %274
    %276 = vset.pattern.permute.xlu0 0
    %277 = vperm.xlu0 %276, %v256
    %v278 = vpop.permute.xlu0 %277
    %279 = vset.pattern.permute.xlu0 0
    %280 = vperm.xlu0 %279, %v257
    %v281 = vpop.permute.xlu0 %280
    %282 = vset.pattern.permute.xlu0 0
    %283 = vperm.xlu0 %282, %v258
    %v284 = vpop.permute.xlu0 %283
    %285 = vset.pattern.permute.xlu0 0
    %286 = vperm.xlu0 %285, %v259
    %v287 = vpop.permute.xlu0 %286
    %288 = vset.pattern.permute.xlu0 0
    %289 = vperm.xlu0 %288, %v260
    %v290 = vpop.permute.xlu0 %289
    %291 = vset.pattern.permute.xlu0 0
    %292 = vperm.xlu0 %291, %v261
    %v293 = vpop.permute.xlu0 %292
    %294 = vset.pattern.permute.xlu0 0
    %295 = vperm.xlu0 %294, %v262
    %v296 = vpop.permute.xlu0 %295
    %297 = vset.pattern.permute.xlu0 0
    %298 = vperm.xlu0 %297, %v263
    %v299 = vpop.permute.xlu0 %298
    %300 = vset.pattern.permute.xlu0 0
    %301 = vperm.xlu0 %300, %v264
    %v302 = vpop.permute.xlu0 %301
    %303 = vset.pattern.permute.xlu0 0
    %304 = vperm.xlu0 %303, %v265
    %v305 = vpop.permute.xlu0 %304
    %306 = vset.pattern.permute.xlu0 0
    %307 = vperm.xlu0 %306, %v266
    %v308 = vpop.permute.xlu0 %307
    %309 = vset.pattern.permute.xlu0 0
    %310 = vperm.xlu0 %309, %v267
    %v311 = vpop.permute.xlu0 %310
    %312 = vset.pattern.permute.xlu0 0
    %313 = vperm.xlu0 %312, %v268
    %v314 = vpop.permute.xlu0 %313
    %315 = vset.pattern.permute.xlu0 0
    %316 = vperm.xlu0 %315, %v269
    %v317 = vpop.permute.xlu0 %316
    %vm318 = vcmp.eq.s32.totalorder %v26, %v272
    %vm319 = vcmp.eq.s32.totalorder %v27, %v272
    %vm320 = vcmp.eq.s32.totalorder %v26, %v275
    %vm321 = vcmp.eq.s32.totalorder %v27, %v275
    %vm322 = vcmp.eq.s32.totalorder %v26, %v278
    %vm323 = vcmp.eq.s32.totalorder %v27, %v278
    %vm324 = vcmp.eq.s32.totalorder %v26, %v281
    %vm325 = vcmp.eq.s32.totalorder %v27, %v281
    %vm326 = vcmp.eq.s32.totalorder %v26, %v284
    %vm327 = vcmp.eq.s32.totalorder %v27, %v284
    %vm328 = vcmp.eq.s32.totalorder %v26, %v287
    %vm329 = vcmp.eq.s32.totalorder %v27, %v287
    %vm330 = vcmp.eq.s32.totalorder %v26, %v290
    %vm331 = vcmp.eq.s32.totalorder %v27, %v290
    %vm332 = vcmp.eq.s32.totalorder %v26, %v293
    %vm333 = vcmp.eq.s32.totalorder %v27, %v293
    %vm334 = vcmp.eq.s32.totalorder %v26, %v296
    %vm335 = vcmp.eq.s32.totalorder %v27, %v296
    %vm336 = vcmp.eq.s32.totalorder %v26, %v299
    %vm337 = vcmp.eq.s32.totalorder %v27, %v299
    %vm338 = vcmp.eq.s32.totalorder %v26, %v302
    %vm339 = vcmp.eq.s32.totalorder %v27, %v302
    %vm340 = vcmp.eq.s32.totalorder %v26, %v305
    %vm341 = vcmp.eq.s32.totalorder %v27, %v305
    %vm342 = vcmp.eq.s32.totalorder %v26, %v308
    %vm343 = vcmp.eq.s32.totalorder %v27, %v308
    %vm344 = vcmp.eq.s32.totalorder %v26, %v311
    %vm345 = vcmp.eq.s32.totalorder %v27, %v311
    %vm346 = vcmp.eq.s32.totalorder %v26, %v314
    %vm347 = vcmp.eq.s32.totalorder %v27, %v314
    %vm348 = vcmp.eq.s32.totalorder %v26, %v317
    %vm349 = vcmp.eq.s32.totalorder %v27, %v317
    %vm350 = vmor %vm221, %vm318
    %vm351 = vmor %vm222, %vm319
    %vm352 = vmor %vm223, %vm320
    %vm353 = vmor %vm224, %vm321
    %vm354 = vmor %vm225, %vm322
    %vm355 = vmor %vm226, %vm323
    %vm356 = vmor %vm227, %vm324
    %vm357 = vmor %vm228, %vm325
    %vm358 = vmor %vm229, %vm326
    %vm359 = vmor %vm230, %vm327
    %vm360 = vmor %vm231, %vm328
    %vm361 = vmor %vm232, %vm329
    %vm362 = vmor %vm233, %vm330
    %vm363 = vmor %vm234, %vm331
    %vm364 = vmor %vm235, %vm332
    %vm365 = vmor %vm236, %vm333
    %vm366 = vmor %vm237, %vm334
    %vm367 = vmor %vm238, %vm335
    %vm368 = vmor %vm239, %vm336
    %vm369 = vmor %vm240, %vm337
    %vm370 = vmor %vm241, %vm338
    %vm371 = vmor %vm242, %vm339
    %vm372 = vmor %vm243, %vm340
    %vm373 = vmor %vm244, %vm341
    %vm374 = vmor %vm245, %vm342
    %vm375 = vmor %vm246, %vm343
    %vm376 = vmor %vm247, %vm344
    %vm377 = vmor %vm248, %vm345
    %vm378 = vmor %vm249, %vm346
    %vm379 = vmor %vm250, %vm347
    %vm380 = vmor %vm251, %vm348
    %vm381 = vmor %vm252, %vm349
    %s382 = scalar_lea.vmem %s0, 384
    %v383 = vld [vmem:[%s382] sm:$0xff]
    %v384 = vld [vmem:[%s382 + $0x8] sm:$0xff]
    %v385 = vld [vmem:[%s382 + $0x10] sm:$0xff]
    %v386 = vld [vmem:[%s382 + $0x18] sm:$0xff]
    %v387 = vld [vmem:[%s382 + $0x20] sm:$0xff]
    %v388 = vld [vmem:[%s382 + $0x28] sm:$0xff]
    %v389 = vld [vmem:[%s382 + $0x30] sm:$0xff]
    %v390 = vld [vmem:[%s382 + $0x38] sm:$0xff]
    %v391 = vld [vmem:[%s382 + $0x40] sm:$0xff]
    %v392 = vld [vmem:[%s382 + $0x48] sm:$0xff]
    %v393 = vld [vmem:[%s382 + $0x50] sm:$0xff]
    %v394 = vld [vmem:[%s382 + $0x58] sm:$0xff]
    %v395 = vld [vmem:[%s382 + $0x60] sm:$0xff]
    %v396 = vld [vmem:[%s382 + $0x68] sm:$0xff]
    %v397 = vld [vmem:[%s382 + $0x70] sm:$0xff]
    %v398 = vld [vmem:[%s382 + $0x78] sm:$0xff]
    %399 = vset.pattern.permute.xlu0 0
    %400 = vperm.xlu0 %399, %v383
    %v401 = vpop.permute.xlu0 %400
    %402 = vset.pattern.permute.xlu0 0
    %403 = vperm.xlu0 %402, %v384
    %v404 = vpop.permute.xlu0 %403
    %405 = vset.pattern.permute.xlu0 0
    %406 = vperm.xlu0 %405, %v385
    %v407 = vpop.permute.xlu0 %406
    %408 = vset.pattern.permute.xlu0 0
    %409 = vperm.xlu0 %408, %v386
    %v410 = vpop.permute.xlu0 %409
    %411 = vset.pattern.permute.xlu0 0
    %412 = vperm.xlu0 %411, %v387
    %v413 = vpop.permute.xlu0 %412
    %414 = vset.pattern.permute.xlu0 0
    %415 = vperm.xlu0 %414, %v388
    %v416 = vpop.permute.xlu0 %415
    %417 = vset.pattern.permute.xlu0 0
    %418 = vperm.xlu0 %417, %v389
    %v419 = vpop.permute.xlu0 %418
    %420 = vset.pattern.permute.xlu0 0
    %421 = vperm.xlu0 %420, %v390
    %v422 = vpop.permute.xlu0 %421
    %423 = vset.pattern.permute.xlu0 0
    %424 = vperm.xlu0 %423, %v391
    %v425 = vpop.permute.xlu0 %424
    %426 = vset.pattern.permute.xlu0 0
    %427 = vperm.xlu0 %426, %v392
    %v428 = vpop.permute.xlu0 %427
    %429 = vset.pattern.permute.xlu0 0
    %430 = vperm.xlu0 %429, %v393
    %v431 = vpop.permute.xlu0 %430
    %432 = vset.pattern.permute.xlu0 0
    %433 = vperm.xlu0 %432, %v394
    %v434 = vpop.permute.xlu0 %433
    %435 = vset.pattern.permute.xlu0 0
    %436 = vperm.xlu0 %435, %v395
    %v437 = vpop.permute.xlu0 %436
    %438 = vset.pattern.permute.xlu0 0
    %439 = vperm.xlu0 %438, %v396
    %v440 = vpop.permute.xlu0 %439
    %441 = vset.pattern.permute.xlu0 0
    %442 = vperm.xlu0 %441, %v397
    %v443 = vpop.permute.xlu0 %442
    %444 = vset.pattern.permute.xlu0 0
    %445 = vperm.xlu0 %444, %v398
    %v446 = vpop.permute.xlu0 %445
    %vm447 = vcmp.eq.s32.totalorder %v26, %v401
    %vm448 = vcmp.eq.s32.totalorder %v27, %v401
    %vm449 = vcmp.eq.s32.totalorder %v26, %v404
    %vm450 = vcmp.eq.s32.totalorder %v27, %v404
    %vm451 = vcmp.eq.s32.totalorder %v26, %v407
    %vm452 = vcmp.eq.s32.totalorder %v27, %v407
    %vm453 = vcmp.eq.s32.totalorder %v26, %v410
    %vm454 = vcmp.eq.s32.totalorder %v27, %v410
    %vm455 = vcmp.eq.s32.totalorder %v26, %v413
    %vm456 = vcmp.eq.s32.totalorder %v27, %v413
    %vm457 = vcmp.eq.s32.totalorder %v26, %v416
    %vm458 = vcmp.eq.s32.totalorder %v27, %v416
    %vm459 = vcmp.eq.s32.totalorder %v26, %v419
    %vm460 = vcmp.eq.s32.totalorder %v27, %v419
    %vm461 = vcmp.eq.s32.totalorder %v26, %v422
    %vm462 = vcmp.eq.s32.totalorder %v27, %v422
    %vm463 = vcmp.eq.s32.totalorder %v26, %v425
    %vm464 = vcmp.eq.s32.totalorder %v27, %v425
    %vm465 = vcmp.eq.s32.totalorder %v26, %v428
    %vm466 = vcmp.eq.s32.totalorder %v27, %v428
    %vm467 = vcmp.eq.s32.totalorder %v26, %v431
    %vm468 = vcmp.eq.s32.totalorder %v27, %v431
    %vm469 = vcmp.eq.s32.totalorder %v26, %v434
    %vm470 = vcmp.eq.s32.totalorder %v27, %v434
    %vm471 = vcmp.eq.s32.totalorder %v26, %v437
    %vm472 = vcmp.eq.s32.totalorder %v27, %v437
    %vm473 = vcmp.eq.s32.totalorder %v26, %v440
    %vm474 = vcmp.eq.s32.totalorder %v27, %v440
    %vm475 = vcmp.eq.s32.totalorder %v26, %v443
    %vm476 = vcmp.eq.s32.totalorder %v27, %v443
    %vm477 = vcmp.eq.s32.totalorder %v26, %v446
    %vm478 = vcmp.eq.s32.totalorder %v27, %v446
    %vm479 = vmor %vm350, %vm447
    %vm480 = vmor %vm351, %vm448
    %vm481 = vmor %vm352, %vm449
    %vm482 = vmor %vm353, %vm450
    %vm483 = vmor %vm354, %vm451
    %vm484 = vmor %vm355, %vm452
    %vm485 = vmor %vm356, %vm453
    %vm486 = vmor %vm357, %vm454
    %vm487 = vmor %vm358, %vm455
    %vm488 = vmor %vm359, %vm456
    %vm489 = vmor %vm360, %vm457
    %vm490 = vmor %vm361, %vm458
    %vm491 = vmor %vm362, %vm459
    %vm492 = vmor %vm363, %vm460
    %vm493 = vmor %vm364, %vm461
    %vm494 = vmor %vm365, %vm462
    %vm495 = vmor %vm366, %vm463
    %vm496 = vmor %vm367, %vm464
    %vm497 = vmor %vm368, %vm465
    %vm498 = vmor %vm369, %vm466
    %vm499 = vmor %vm370, %vm467
    %vm500 = vmor %vm371, %vm468
    %vm501 = vmor %vm372, %vm469
    %vm502 = vmor %vm373, %vm470
    %vm503 = vmor %vm374, %vm471
    %vm504 = vmor %vm375, %vm472
    %vm505 = vmor %vm376, %vm473
    %vm506 = vmor %vm377, %vm474
    %vm507 = vmor %vm378, %vm475
    %vm508 = vmor %vm379, %vm476
    %vm509 = vmor %vm380, %vm477
    %vm510 = vmor %vm381, %vm478
    %s511 = scalar_lea.vmem %s0, 512
    %v512 = vld [vmem:[%s511] sm:$0xff]
    %v513 = vld [vmem:[%s511 + $0x8] sm:$0xff]
    %v514 = vld [vmem:[%s511 + $0x10] sm:$0xff]
    %v515 = vld [vmem:[%s511 + $0x18] sm:$0xff]
    %v516 = vld [vmem:[%s511 + $0x20] sm:$0xff]
    %v517 = vld [vmem:[%s511 + $0x28] sm:$0xff]
    %v518 = vld [vmem:[%s511 + $0x30] sm:$0xff]
    %v519 = vld [vmem:[%s511 + $0x38] sm:$0xff]
    %v520 = vld [vmem:[%s511 + $0x40] sm:$0xff]
    %v521 = vld [vmem:[%s511 + $0x48] sm:$0xff]
    %v522 = vld [vmem:[%s511 + $0x50] sm:$0xff]
    %v523 = vld [vmem:[%s511 + $0x58] sm:$0xff]
    %v524 = vld [vmem:[%s511 + $0x60] sm:$0xff]
    %v525 = vld [vmem:[%s511 + $0x68] sm:$0xff]
    %v526 = vld [vmem:[%s511 + $0x70] sm:$0xff]
    %v527 = vld [vmem:[%s511 + $0x78] sm:$0xff]
    %528 = vset.pattern.permute.xlu0 0
    %529 = vperm.xlu0 %528, %v512
    %v530 = vpop.permute.xlu0 %529
    %531 = vset.pattern.permute.xlu0 0
    %532 = vperm.xlu0 %531, %v513
    %v533 = vpop.permute.xlu0 %532
    %534 = vset.pattern.permute.xlu0 0
    %535 = vperm.xlu0 %534, %v514
    %v536 = vpop.permute.xlu0 %535
    %537 = vset.pattern.permute.xlu0 0
    %538 = vperm.xlu0 %537, %v515
    %v539 = vpop.permute.xlu0 %538
    %540 = vset.pattern.permute.xlu0 0
    %541 = vperm.xlu0 %540, %v516
    %v542 = vpop.permute.xlu0 %541
    %543 = vset.pattern.permute.xlu0 0
    %544 = vperm.xlu0 %543, %v517
    %v545 = vpop.permute.xlu0 %544
    %546 = vset.pattern.permute.xlu0 0
    %547 = vperm.xlu0 %546, %v518
    %v548 = vpop.permute.xlu0 %547
    %549 = vset.pattern.permute.xlu0 0
    %550 = vperm.xlu0 %549, %v519
    %v551 = vpop.permute.xlu0 %550
    %552 = vset.pattern.permute.xlu0 0
    %553 = vperm.xlu0 %552, %v520
    %v554 = vpop.permute.xlu0 %553
    %555 = vset.pattern.permute.xlu0 0
    %556 = vperm.xlu0 %555, %v521
    %v557 = vpop.permute.xlu0 %556
    %558 = vset.pattern.permute.xlu0 0
    %559 = vperm.xlu0 %558, %v522
    %v560 = vpop.permute.xlu0 %559
    %561 = vset.pattern.permute.xlu0 0
    %562 = vperm.xlu0 %561, %v523
    %v563 = vpop.permute.xlu0 %562
    %564 = vset.pattern.permute.xlu0 0
    %565 = vperm.xlu0 %564, %v524
    %v566 = vpop.permute.xlu0 %565
    %567 = vset.pattern.permute.xlu0 0
    %568 = vperm.xlu0 %567, %v525
    %v569 = vpop.permute.xlu0 %568
    %570 = vset.pattern.permute.xlu0 0
    %571 = vperm.xlu0 %570, %v526
    %v572 = vpop.permute.xlu0 %571
    %573 = vset.pattern.permute.xlu0 0
    %574 = vperm.xlu0 %573, %v527
    %v575 = vpop.permute.xlu0 %574
    %vm576 = vcmp.eq.s32.totalorder %v26, %v530
    %vm577 = vcmp.eq.s32.totalorder %v27, %v530
    %vm578 = vcmp.eq.s32.totalorder %v26, %v533
    %vm579 = vcmp.eq.s32.totalorder %v27, %v533
    %vm580 = vcmp.eq.s32.totalorder %v26, %v536
    %vm581 = vcmp.eq.s32.totalorder %v27, %v536
    %vm582 = vcmp.eq.s32.totalorder %v26, %v539
    %vm583 = vcmp.eq.s32.totalorder %v27, %v539
    %vm584 = vcmp.eq.s32.totalorder %v26, %v542
    %vm585 = vcmp.eq.s32.totalorder %v27, %v542
    %vm586 = vcmp.eq.s32.totalorder %v26, %v545
    %vm587 = vcmp.eq.s32.totalorder %v27, %v545
    %vm588 = vcmp.eq.s32.totalorder %v26, %v548
    %vm589 = vcmp.eq.s32.totalorder %v27, %v548
    %vm590 = vcmp.eq.s32.totalorder %v26, %v551
    %vm591 = vcmp.eq.s32.totalorder %v27, %v551
    %vm592 = vcmp.eq.s32.totalorder %v26, %v554
    %vm593 = vcmp.eq.s32.totalorder %v27, %v554
    %vm594 = vcmp.eq.s32.totalorder %v26, %v557
    %vm595 = vcmp.eq.s32.totalorder %v27, %v557
    %vm596 = vcmp.eq.s32.totalorder %v26, %v560
    %vm597 = vcmp.eq.s32.totalorder %v27, %v560
    %vm598 = vcmp.eq.s32.totalorder %v26, %v563
    %vm599 = vcmp.eq.s32.totalorder %v27, %v563
    %vm600 = vcmp.eq.s32.totalorder %v26, %v566
    %vm601 = vcmp.eq.s32.totalorder %v27, %v566
    %vm602 = vcmp.eq.s32.totalorder %v26, %v569
    %vm603 = vcmp.eq.s32.totalorder %v27, %v569
    %vm604 = vcmp.eq.s32.totalorder %v26, %v572
    %vm605 = vcmp.eq.s32.totalorder %v27, %v572
    %vm606 = vcmp.eq.s32.totalorder %v26, %v575
    %vm607 = vcmp.eq.s32.totalorder %v27, %v575
    %vm608 = vmor %vm479, %vm576
    %vm609 = vmor %vm480, %vm577
    %vm610 = vmor %vm481, %vm578
    %vm611 = vmor %vm482, %vm579
    %vm612 = vmor %vm483, %vm580
    %vm613 = vmor %vm484, %vm581
    %vm614 = vmor %vm485, %vm582
    %vm615 = vmor %vm486, %vm583
    %vm616 = vmor %vm487, %vm584
    %vm617 = vmor %vm488, %vm585
    %vm618 = vmor %vm489, %vm586
    %vm619 = vmor %vm490, %vm587
    %vm620 = vmor %vm491, %vm588
    %vm621 = vmor %vm492, %vm589
    %vm622 = vmor %vm493, %vm590
    %vm623 = vmor %vm494, %vm591
    %vm624 = vmor %vm495, %vm592
    %vm625 = vmor %vm496, %vm593
    %vm626 = vmor %vm497, %vm594
    %vm627 = vmor %vm498, %vm595
    %vm628 = vmor %vm499, %vm596
    %vm629 = vmor %vm500, %vm597
    %vm630 = vmor %vm501, %vm598
    %vm631 = vmor %vm502, %vm599
    %vm632 = vmor %vm503, %vm600
    %vm633 = vmor %vm504, %vm601
    %vm634 = vmor %vm505, %vm602
    %vm635 = vmor %vm506, %vm603
    %vm636 = vmor %vm507, %vm604
    %vm637 = vmor %vm508, %vm605
    %vm638 = vmor %vm509, %vm606
    %vm639 = vmor %vm510, %vm607
    %v640 = vsel %vm608, 1.0, 0.0
    %v641 = vsel %vm609, 1.0, 0.0
    %v642 = vsel %vm610, 1.0, 0.0
    %v643 = vsel %vm611, 1.0, 0.0
    %v644 = vsel %vm612, 1.0, 0.0
    %v645 = vsel %vm613, 1.0, 0.0
    %v646 = vsel %vm614, 1.0, 0.0
    %v647 = vsel %vm615, 1.0, 0.0
    %v648 = vsel %vm616, 1.0, 0.0
    %v649 = vsel %vm617, 1.0, 0.0
    %v650 = vsel %vm618, 1.0, 0.0
    %v651 = vsel %vm619, 1.0, 0.0
    %v652 = vsel %vm620, 1.0, 0.0
    %v653 = vsel %vm621, 1.0, 0.0
    %v654 = vsel %vm622, 1.0, 0.0
    %v655 = vsel %vm623, 1.0, 0.0
    %v656 = vsel %vm624, 1.0, 0.0
    %v657 = vsel %vm625, 1.0, 0.0
    %v658 = vsel %vm626, 1.0, 0.0
    %v659 = vsel %vm627, 1.0, 0.0
    %v660 = vsel %vm628, 1.0, 0.0
    %v661 = vsel %vm629, 1.0, 0.0
    %v662 = vsel %vm630, 1.0, 0.0
    %v663 = vsel %vm631, 1.0, 0.0
    %v664 = vsel %vm632, 1.0, 0.0
    %v665 = vsel %vm633, 1.0, 0.0
    %v666 = vsel %vm634, 1.0, 0.0
    %v667 = vsel %vm635, 1.0, 0.0
    %v668 = vsel %vm636, 1.0, 0.0
    %v669 = vsel %vm637, 1.0, 0.0
    %v670 = vsel %vm638, 1.0, 0.0
    %v671 = vsel %vm639, 1.0, 0.0
    %v672 = vpack.c.bf16 %v642, %v640
    %v673 = vpack.c.bf16 %v643, %v641
    %v674 = vpack.c.bf16 %v646, %v644
    %v675 = vpack.c.bf16 %v647, %v645
    %v676 = vpack.c.bf16 %v650, %v648
    %v677 = vpack.c.bf16 %v651, %v649
    %v678 = vpack.c.bf16 %v654, %v652
    %v679 = vpack.c.bf16 %v655, %v653
    %v680 = vpack.c.bf16 %v658, %v656
    %v681 = vpack.c.bf16 %v659, %v657
    %v682 = vpack.c.bf16 %v662, %v660
    %v683 = vpack.c.bf16 %v663, %v661
    %v684 = vpack.c.bf16 %v666, %v664
    %v685 = vpack.c.bf16 %v667, %v665
    %v686 = vpack.c.bf16 %v670, %v668
    %v687 = vpack.c.bf16 %v671, %v669
    %v688 = vld [vmem:[%s1] sm:$0xf]
    %v689 = vld [vmem:[%s1 + $0x4] sm:$0xf]
    %v690 = vld [vmem:[%s1 + $0x8] sm:$0xf]
    %v691 = vld [vmem:[%s1 + $0xc] sm:$0xf]
    %v692 = vld [vmem:[%s1 + $0x10] sm:$0xf]
    %v693 = vld [vmem:[%s1 + $0x14] sm:$0xf]
    %v694 = vld [vmem:[%s1 + $0x18] sm:$0xf]
    %v695 = vld [vmem:[%s1 + $0x1c] sm:$0xf]
    %v696 = vld [vmem:[%s1 + $0x20] sm:$0xf]
    %v697 = vld [vmem:[%s1 + $0x24] sm:$0xf]
    %v698 = vld [vmem:[%s1 + $0x28] sm:$0xf]
    %v699 = vld [vmem:[%s1 + $0x2c] sm:$0xf]
    %v700 = vld [vmem:[%s1 + $0x30] sm:$0xf]
    %v701 = vld [vmem:[%s1 + $0x34] sm:$0xf]
    %v702 = vld [vmem:[%s1 + $0x38] sm:$0xf]
    %v703 = vld [vmem:[%s1 + $0x3c] sm:$0xf]
    %v704 = vld [vmem:[%s1 + $0x40] sm:$0xf]
    %v705 = vld [vmem:[%s1 + $0x44] sm:$0xf]
    %v706 = vld [vmem:[%s1 + $0x48] sm:$0xf]
    %v707 = vld [vmem:[%s1 + $0x4c] sm:$0xf]
    %v708 = vld [vmem:[%s1 + $0x50] sm:$0xf]
    %v709 = vld [vmem:[%s1 + $0x54] sm:$0xf]
    %v710 = vld [vmem:[%s1 + $0x58] sm:$0xf]
    %v711 = vld [vmem:[%s1 + $0x5c] sm:$0xf]
    %v712 = vld [vmem:[%s1 + $0x60] sm:$0xf]
    %v713 = vld [vmem:[%s1 + $0x64] sm:$0xf]
    %v714 = vld [vmem:[%s1 + $0x68] sm:$0xf]
    %v715 = vld [vmem:[%s1 + $0x6c] sm:$0xf]
    %v716 = vld [vmem:[%s1 + $0x70] sm:$0xf]
    %v717 = vld [vmem:[%s1 + $0x74] sm:$0xf]
    %v718 = vld [vmem:[%s1 + $0x78] sm:$0xf]
    %v719 = vld [vmem:[%s1 + $0x7c] sm:$0xf]
    %v720 = vld [vmem:[%s2] sm:$0x1]
    %v722 = vperm.slane %v720, 0
    %v756 = vunpack.c.l.b16 %v688
    %v757 = vunpack.c.l.b16 %v689
    %v758 = vunpack.c.l.b16 %v690
    %v759 = vunpack.c.l.b16 %v691
    %v760 = vunpack.c.l.b16 %v692
    %v761 = vunpack.c.l.b16 %v693
    %v762 = vunpack.c.l.b16 %v694
    %v763 = vunpack.c.l.b16 %v695
    %v764 = vunpack.c.l.b16 %v696
    %v765 = vunpack.c.l.b16 %v697
    %v766 = vunpack.c.l.b16 %v698
    %v767 = vunpack.c.l.b16 %v699
    %v768 = vunpack.c.l.b16 %v700
    %v769 = vunpack.c.l.b16 %v701
    %v770 = vunpack.c.l.b16 %v702
    %v771 = vunpack.c.l.b16 %v703
    %v772 = vunpack.c.l.b16 %v704
    %v773 = vunpack.c.l.b16 %v705
    %v774 = vunpack.c.l.b16 %v706
    %v775 = vunpack.c.l.b16 %v707
    %v776 = vunpack.c.l.b16 %v708
    %v777 = vunpack.c.l.b16 %v709
    %v778 = vunpack.c.l.b16 %v710
    %v779 = vunpack.c.l.b16 %v711
    %v780 = vunpack.c.l.b16 %v712
    %v781 = vunpack.c.l.b16 %v713
    %v782 = vunpack.c.l.b16 %v714
    %v783 = vunpack.c.l.b16 %v715
    %v784 = vunpack.c.l.b16 %v716
    %v785 = vunpack.c.l.b16 %v717
    %v786 = vunpack.c.l.b16 %v718
    %v787 = vunpack.c.l.b16 %v719
    %v788 = vpack.c.b16 %v757, %v756
    %v789 = vpack.c.b16 %v759, %v758
    %v790 = vpack.c.b16 %v761, %v760
    %v791 = vpack.c.b16 %v763, %v762
    %v792 = vpack.c.b16 %v765, %v764
    %v793 = vpack.c.b16 %v767, %v766
    %v794 = vpack.c.b16 %v769, %v768
    %v795 = vpack.c.b16 %v771, %v770
    %v796 = vpack.c.b16 %v773, %v772
    %v797 = vpack.c.b16 %v775, %v774
    %v798 = vpack.c.b16 %v777, %v776
    %v799 = vpack.c.b16 %v779, %v778
    %v800 = vpack.c.b16 %v781, %v780
    %v801 = vpack.c.b16 %v783, %v782
    %v802 = vpack.c.b16 %v785, %v784
    %v803 = vpack.c.b16 %v787, %v786
    %820 = vmatpush.bf16.msra.mxu0 %v795
    %821 = vmatpush.bf16.msra.mxu0 %v794
    %822 = vmatpush.bf16.msra.mxu0 %v793
    %823 = vmatpush.bf16.msra.mxu0 %v792
    %824 = vmatpush.bf16.msra.mxu0 %v791
    %825 = vmatpush.bf16.msra.mxu0 %v790
    %826 = vmatpush.bf16.msra.mxu0 %v789
    %827 = vmatpush.bf16.msra.mxu0 %v788
    %828 = vmatmul.bf16.gmra.mxu0 %v672
    %v829 = vpop.f32.mrf.mxu0
    %v830 = vadd.f32 %v722, %v829
    %v831 = vpop.f32.mrf.mxu0
    %v832 = vadd.f32 %v722, %v831
    %833 = vmatmul.bf16.gmra.mxu0 %v674
    %v834 = vpop.f32.mrf.mxu0
    %v835 = vadd.f32 %v722, %v834
    %v836 = vpop.f32.mrf.mxu0
    %v837 = vadd.f32 %v722, %v836
    %838 = vmatmul.bf16.gmra.mxu0 %v676
    %v839 = vpop.f32.mrf.mxu0
    %v840 = vadd.f32 %v722, %v839
    %v841 = vpop.f32.mrf.mxu0
    %v842 = vadd.f32 %v722, %v841
    %843 = vmatmul.bf16.gmra.mxu0 %v678
    %v844 = vpop.f32.mrf.mxu0
    %v845 = vadd.f32 %v722, %v844
    %v846 = vpop.f32.mrf.mxu0
    %v847 = vadd.f32 %v722, %v846
    %848 = vmatmul.bf16.gmra.mxu0 %v680
    %v849 = vpop.f32.mrf.mxu0
    %v850 = vadd.f32 %v722, %v849
    %v851 = vpop.f32.mrf.mxu0
    %v852 = vadd.f32 %v722, %v851
    %853 = vmatmul.bf16.gmra.mxu0 %v682
    %v854 = vpop.f32.mrf.mxu0
    %v855 = vadd.f32 %v722, %v854
    %v856 = vpop.f32.mrf.mxu0
    %v857 = vadd.f32 %v722, %v856
    %858 = vmatmul.bf16.gmra.mxu0 %v684
    %v859 = vpop.f32.mrf.mxu0
    %v860 = vadd.f32 %v722, %v859
    %v861 = vpop.f32.mrf.mxu0
    %v862 = vadd.f32 %v722, %v861
    %863 = vmatmul.bf16.gmra.mxu0 %v686
    %v864 = vpop.f32.mrf.mxu0
    %v865 = vadd.f32 %v722, %v864
    %v866 = vpop.f32.mrf.mxu0
    %v867 = vadd.f32 %v722, %v866
    %868 = vdwg.mxu0
    %869 = vmatpush.bf16.msra.mxu0 %v803
    %870 = vmatpush.bf16.msra.mxu0 %v802
    %871 = vmatpush.bf16.msra.mxu0 %v801
    %872 = vmatpush.bf16.msra.mxu0 %v800
    %873 = vmatpush.bf16.msra.mxu0 %v799
    %874 = vmatpush.bf16.msra.mxu0 %v798
    %875 = vmatpush.bf16.msra.mxu0 %v797
    %876 = vmatpush.bf16.msra.mxu0 %v796
    %877 = vmatmul.bf16.gmra.mxu0 %v673
    %v878 = vpop.f32.mrf.mxu0
    %v879 = vadd.f32 %v830, %v878
    %v880 = vpop.f32.mrf.mxu0
    %v881 = vadd.f32 %v832, %v880
    %882 = vmatmul.bf16.gmra.mxu0 %v675
    %v883 = vpop.f32.mrf.mxu0
    %v884 = vadd.f32 %v835, %v883
    %v885 = vpop.f32.mrf.mxu0
    %v886 = vadd.f32 %v837, %v885
    %887 = vmatmul.bf16.gmra.mxu0 %v677
    %v888 = vpop.f32.mrf.mxu0
    %v889 = vadd.f32 %v840, %v888
    %v890 = vpop.f32.mrf.mxu0
    %v891 = vadd.f32 %v842, %v890
    %892 = vmatmul.bf16.gmra.mxu0 %v679
    %v893 = vpop.f32.mrf.mxu0
    %v894 = vadd.f32 %v845, %v893
    %v895 = vpop.f32.mrf.mxu0
    %v896 = vadd.f32 %v847, %v895
    %897 = vmatmul.bf16.gmra.mxu0 %v681
    %v898 = vpop.f32.mrf.mxu0
    %v899 = vadd.f32 %v850, %v898
    %v900 = vpop.f32.mrf.mxu0
    %v901 = vadd.f32 %v852, %v900
    %902 = vmatmul.bf16.gmra.mxu0 %v683
    %v903 = vpop.f32.mrf.mxu0
    %v904 = vadd.f32 %v855, %v903
    %v905 = vpop.f32.mrf.mxu0
    %v906 = vadd.f32 %v857, %v905
    %907 = vmatmul.bf16.gmra.mxu0 %v685
    %v908 = vpop.f32.mrf.mxu0
    %v909 = vadd.f32 %v860, %v908
    %v910 = vpop.f32.mrf.mxu0
    %v911 = vadd.f32 %v862, %v910
    %912 = vmatmul.bf16.gmra.mxu0 %v687
    %v913 = vpop.f32.mrf.mxu0
    %v914 = vadd.f32 %v865, %v913
    %v915 = vpop.f32.mrf.mxu0
    %v916 = vadd.f32 %v867, %v915
    %917 = vdwg.mxu0
    %v918 = vmax.f32 %v879, 0.0
    %v919 = vmax.f32 %v881, 0.0
    %v920 = vmax.f32 %v884, 0.0
    %v921 = vmax.f32 %v886, 0.0
    %v922 = vmax.f32 %v889, 0.0
    %v923 = vmax.f32 %v891, 0.0
    %v924 = vmax.f32 %v894, 0.0
    %v925 = vmax.f32 %v896, 0.0
    %v926 = vmax.f32 %v899, 0.0
    %v927 = vmax.f32 %v901, 0.0
    %v928 = vmax.f32 %v904, 0.0
    %v929 = vmax.f32 %v906, 0.0
    %v930 = vmax.f32 %v909, 0.0
    %v931 = vmax.f32 %v911, 0.0
    %v932 = vmax.f32 %v914, 0.0
    %v933 = vmax.f32 %v916, 0.0
    %v934 = vld [vmem:[%s3] sm:$0xff]
    %v935 = vld [vmem:[%s3 + $0x8] sm:$0xff]
    %v936 = vmul.f32 %v918, %v934
    %v937 = vmul.f32 %v919, %v935
    %v938 = vmul.f32 %v920, %v934
    %v939 = vmul.f32 %v921, %v935
    %v940 = vmul.f32 %v922, %v934
    %v941 = vmul.f32 %v923, %v935
    %v942 = vmul.f32 %v924, %v934
    %v943 = vmul.f32 %v925, %v935
    %v944 = vmul.f32 %v926, %v934
    %v945 = vmul.f32 %v927, %v935
    %v946 = vmul.f32 %v928, %v934
    %v947 = vmul.f32 %v929, %v935
    %v948 = vmul.f32 %v930, %v934
    %v949 = vmul.f32 %v931, %v935
    %v950 = vmul.f32 %v932, %v934
    %v951 = vmul.f32 %v933, %v935
    %vm952 = vcmask 392192
    %v953 = vsel %vm952, %v936, -inf
    %v954 = vsel %vm952, %v937, -inf
    %v955 = vmax.f32 %v953, %v954
    %v956 = vrot.slane %v955, 4
    %v957 = vmax.f32 %v955, %v956
    %v958 = vrot.slane %v957, 2
    %v959 = vmax.f32 %v957, %v958
    %v960 = vrot.slane %v959, 1
    %v961 = vmax.f32 %v959, %v960
    %v962 = vsel %vm952, %v938, -inf
    %v963 = vsel %vm952, %v939, -inf
    %v964 = vmax.f32 %v962, %v963
    %v965 = vrot.slane %v964, 4
    %v966 = vmax.f32 %v964, %v965
    %v967 = vrot.slane %v966, 2
    %v968 = vmax.f32 %v966, %v967
    %v969 = vrot.slane %v968, 1
    %v970 = vmax.f32 %v968, %v969
    %v971 = vsel %vm952, %v940, -inf
    %v972 = vsel %vm952, %v941, -inf
    %v973 = vmax.f32 %v971, %v972
    %v974 = vrot.slane %v973, 4
    %v975 = vmax.f32 %v973, %v974
    %v976 = vrot.slane %v975, 2
    %v977 = vmax.f32 %v975, %v976
    %v978 = vrot.slane %v977, 1
    %v979 = vmax.f32 %v977, %v978
    %v980 = vsel %vm952, %v942, -inf
    %v981 = vsel %vm952, %v943, -inf
    %v982 = vmax.f32 %v980, %v981
    %v983 = vrot.slane %v982, 4
    %v984 = vmax.f32 %v982, %v983
    %v985 = vrot.slane %v984, 2
    %v986 = vmax.f32 %v984, %v985
    %v987 = vrot.slane %v986, 1
    %v988 = vmax.f32 %v986, %v987
    %v989 = vsel %vm952, %v944, -inf
    %v990 = vsel %vm952, %v945, -inf
    %v991 = vmax.f32 %v989, %v990
    %v992 = vrot.slane %v991, 4
    %v993 = vmax.f32 %v991, %v992
    %v994 = vrot.slane %v993, 2
    %v995 = vmax.f32 %v993, %v994
    %v996 = vrot.slane %v995, 1
    %v997 = vmax.f32 %v995, %v996
    %v998 = vsel %vm952, %v946, -inf
    %v999 = vsel %vm952, %v947, -inf
    %v1000 = vmax.f32 %v998, %v999
    %v1001 = vrot.slane %v1000, 4
    %v1002 = vmax.f32 %v1000, %v1001
    %v1003 = vrot.slane %v1002, 2
    %v1004 = vmax.f32 %v1002, %v1003
    %v1005 = vrot.slane %v1004, 1
    %v1006 = vmax.f32 %v1004, %v1005
    %v1007 = vsel %vm952, %v948, -inf
    %v1008 = vsel %vm952, %v949, -inf
    %v1009 = vmax.f32 %v1007, %v1008
    %v1010 = vrot.slane %v1009, 4
    %v1011 = vmax.f32 %v1009, %v1010
    %v1012 = vrot.slane %v1011, 2
    %v1013 = vmax.f32 %v1011, %v1012
    %v1014 = vrot.slane %v1013, 1
    %v1015 = vmax.f32 %v1013, %v1014
    %v1016 = vsel %vm952, %v950, -inf
    %v1017 = vsel %vm952, %v951, -inf
    %v1018 = vmax.f32 %v1016, %v1017
    %v1019 = vrot.slane %v1018, 4
    %v1020 = vmax.f32 %v1018, %v1019
    %v1021 = vrot.slane %v1020, 2
    %v1022 = vmax.f32 %v1020, %v1021
    %v1023 = vrot.slane %v1022, 1
    %v1024 = vmax.f32 %v1022, %v1023
    %v1025 = vpack.c.bf16 %v961, %v961
    %v1026 = vpack.c.bf16 %v970, %v970
    %v1027 = vpack.c.bf16 %v979, %v979
    %v1028 = vpack.c.bf16 %v988, %v988
    %v1029 = vpack.c.bf16 %v997, %v997
    %v1030 = vpack.c.bf16 %v1006, %v1006
    %v1031 = vpack.c.bf16 %v1015, %v1015
    %v1032 = vpack.c.bf16 %v1024, %v1024
    %v1033 = vld [vmem:[%s4] sm:$0xf]
    %v1034 = vld [vmem:[%s4 + $0x4] sm:$0xf]
    %v1035 = vld [vmem:[%s4 + $0x8] sm:$0xf]
    %v1036 = vld [vmem:[%s4 + $0xc] sm:$0xf]
    %v1037 = vld [vmem:[%s4 + $0x10] sm:$0xf]
    %v1038 = vld [vmem:[%s4 + $0x14] sm:$0xf]
    %v1039 = vld [vmem:[%s5] sm:$0x1]
    %v1041 = vperm.slane %v1039, 0
    %v1051 = vunpack.c.l.b16 %v1025
    %v1052 = vunpack.c.l.b16 %v1026
    %v1053 = vunpack.c.l.b16 %v1027
    %v1054 = vunpack.c.l.b16 %v1028
    %v1055 = vunpack.c.l.b16 %v1029
    %v1056 = vunpack.c.l.b16 %v1030
    %v1057 = vunpack.c.l.b16 %v1031
    %v1058 = vunpack.c.l.b16 %v1032
    %vm1059 = vcmask 1041409
    %v1060 = vsel %vm1059, %v1052, %v1051
    %vm1061 = vcmask 1042434
    %v1062 = vsel %vm1061, %v1053, %v1060
    %vm1063 = vcmask 1043459
    %v1064 = vsel %vm1063, %v1054, %v1062
    %vm1065 = vcmask 1044484
    %v1066 = vsel %vm1065, %v1055, %v1064
    %vm1067 = vcmask 1045509
    %v1068 = vsel %vm1067, %v1056, %v1066
    %vm1069 = vcmask 1046534
    %v1070 = vsel %vm1069, %v1057, %v1068
    %vm1071 = vcmask 1047559
    %v1072 = vsel %vm1071, %v1058, %v1070
    %v1073 = vpack.c.b16 %v1072, %v1072
    %v1080 = vunpack.c.l.b16 %v1033
    %v1081 = vunpack.c.l.b16 %v1034
    %v1082 = vunpack.c.l.b16 %v1035
    %v1083 = vunpack.c.l.b16 %v1036
    %v1084 = vunpack.c.l.b16 %v1037
    %v1085 = vunpack.c.l.b16 %v1038
    %v1086 = vpack.c.b16 %v1081, %v1080
    %v1087 = vpack.c.b16 %v1083, %v1082
    %v1088 = vpack.c.b16 %v1085, %v1084
    %v1093 = vsel %vm952, %v1073, 0
    %1095 = vmatpush.bf16.msra.mxu0 0
    %1096 = vmatpush.bf16.msra.mxu0 0
    %1097 = vmatpush.bf16.msra.mxu0 0
    %1098 = vmatpush.bf16.msra.mxu0 0
    %1099 = vmatpush.bf16.msra.mxu0 0
    %1100 = vmatpush.bf16.msra.mxu0 %v1088
    %1101 = vmatpush.bf16.msra.mxu0 %v1087
    %1102 = vmatpush.bf16.msra.mxu0 %v1086
    %1103 = vmatmul.bf16.gmra.mxu0 %v1093
    %v1104 = vpop.f32.mrf.mxu0
    %v1105 = vadd.f32 %v1041, %v1104
    %v1106 = vpop.f32.mrf.mxu0
    %1107 = vdwg.mxu0
    %1108 = vst [vmem:[#allocation2] sm:$0xff] %v1105
    // Predicated region
    $region26: #{tpu_custom_call.1} parent=1 // pred_check
      _
    $region27: #{tpu_custom_call.1} parent=1 // pred_check_branch
      %1110 = sbr.rel (0) target = $region29
    $region28: #{tpu_custom_call.1} parent=1 // pred_region
      %1112 = vsyncadd [#allocation3], 0
      %s1114 = sshll.u32 [#allocation2], 4
      %s1115 = int_to_ptr.vmem [resolvable:$true] %s1114
      %s1116 = sshll.u32 %s6, 4
      %s1117 = int_to_ptr.hbm [resolvable:$true] %s1116
      %1119 = dma.vmem_to_hbm [thread:$0]  %s1115, 128, %s1117, [#allocation3]
    $region29: #{tpu_custom_call.1} parent=1 // pred_fallthru
      _
    // Predicated region
    $region30: #{tpu_custom_call.1} parent=1 // pred_check
      _
    $region31: #{tpu_custom_call.1} parent=1 // pred_check_branch
      %1121 = sbr.rel (0) target = $region33
    $region32: #{tpu_custom_call.1} parent=1 // pred_region
      %1123 = dma.done [#allocation3], 128
    $region33: #{tpu_custom_call.1} parent=1 // pred_fallthru
      _
    %1124 = vsyncpa [#allocation3], 1

</llo_original>
